<compile_context>
chip_gen: v6e
topology: v6e:2x2x1
jax: 0.10.0
libtpu: 0.0.40
codegen_flags: <defaults>
</compile_context>

<pallas_src>
import math

import jax
import jax.numpy as jnp
from jax.experimental import pallas as pl
from jax.experimental.pallas import tpu as pltpu

EPS = 1e-5            # F.layer_norm default
L2NORM_EPS = 1e-12    # F.normalize default
ATTN_SCALE = 8.0      # Attention(scale=8) default used by TransformerBlocks


# ----------------------------------------------------------------------------
# Generation-aware tiling constants
# ----------------------------------------------------------------------------
def _physical_vmem_bytes():
    try:
        info = pltpu.get_tpu_info()
        v = getattr(info, "vmem_capacity_bytes", None)
        if v:
            return int(v)
    except Exception:
        pass
    return 64 * 1024 * 1024   # conservative (v7x-sized) fallback


_VMEM_PHYS = _physical_vmem_bytes()
if _VMEM_PHYS >= 100 * 1024 * 1024:
    # v5e / v6e: 128 MiB VMEM per core -> spend it.
    VMEM_LIMIT = 96 * 1024 * 1024
    ROW_CAP_MM, COL_CAP_MM, K_CAP_MM, TQ_CAP = 512, 1024, 1024, 512
else:
    # v7x (64 MiB per core) or unknown.
    VMEM_LIMIT = 48 * 1024 * 1024
    ROW_CAP_MM, COL_CAP_MM, K_CAP_MM, TQ_CAP = 256, 512, 512, 256


def _row_tile(rows, cap):
    # Full extent is always a legal block shape; otherwise the cap (mult. of 32).
    return rows if rows <= cap else cap


def _col_tile(cols, cap):
    return cols if cols <= cap else cap


def _red_tile(d, cap):
    # K-reduction tile: only split when it divides cleanly (keeps the scratch
    # slicing exact); otherwise keep the full reduction dim in one block.
    if d <= cap or d % cap != 0:
        return d
    return cap


def _layer_norm_f32(x, gamma):
    """Centered two-pass LayerNorm in f32 (beta omitted: it is a zero buffer)."""
    mean = jnp.mean(x, axis=-1, keepdims=True)
    xc = x - mean
    var = jnp.mean(xc * xc, axis=-1, keepdims=True)
    return xc * jax.lax.rsqrt(var + EPS) * gamma


def _l2norm_f32(t):
    return t * jax.lax.rsqrt(
        jnp.maximum(jnp.sum(t * t, axis=-1, keepdims=True),
                    L2NORM_EPS * L2NORM_EPS))


def _gelu_tanh(x):
    # TODO(synk): PyTorch F.gelu defaults to the exact erf formulation; the tanh
    # approximation is used because erf lowering support in Mosaic is uncertain.
    c = math.sqrt(2.0 / math.pi)
    return 0.5 * x * (1.0 + jnp.tanh(c * (x + 0.044715 * x * x * x)))


# ----------------------------------------------------------------------------
# 1) Standalone LayerNorm (final norm only)
# ----------------------------------------------------------------------------
def _ln_kernel(x_ref, gamma_ref, o_ref):
    x = x_ref[...].astype(jnp.float32)
    g = gamma_ref[...].astype(jnp.float32)
    o_ref[...] = _layer_norm_f32(x, g).astype(o_ref.dtype)


def _ln_row_tile(rows, d):
    # in + out blocks, double-buffered, f32 -> 4 * tr * d * 4 bytes.
    budget = VMEM_LIMIT // 2
    tr = budget // (4 * max(d, 1) * 4)
    tr = max(8, (tr // 8) * 8)
    tr = min(tr, 2048)
    return rows if rows <= tr else tr


def layer_norm(x, gamma):
    shape = x.shape
    d = shape[-1]
    rows = int(math.prod(shape[:-1])) if len(shape) > 1 else 1
    x2 = x.reshape(rows, d)
    tr = _ln_row_tile(rows, d)
    out = pl.pallas_call(
        _ln_kernel,
        out_shape=jax.ShapeDtypeStruct((rows, d), x.dtype),
        grid_spec=pltpu.PrefetchScalarGridSpec(
            num_scalar_prefetch=0,
            grid=(pl.cdiv(rows, tr),),
            in_specs=[
                pl.BlockSpec((tr, d), lambda i: (i, 0)),
                pl.BlockSpec((1, d), lambda i: (0, 0)),
            ],
            out_specs=pl.BlockSpec((tr, d), lambda i: (i, 0)),
        ),
        compiler_params=pltpu.CompilerParams(
            dimension_semantics=("parallel",),
            vmem_limit_bytes=VMEM_LIMIT,
        ),
    )(x2, gamma.reshape(1, d))
    return out.reshape(shape)


# ----------------------------------------------------------------------------
# 2) (optional LayerNorm) fused into N bias-free Linears sharing one input
#    Grid = (rows, out-cols, reduction).  The normalized activation is computed
#    once per row block (j==0, k==0) into a bf16 scratch and reused for every
#    output-column / reduction block and for every weight.
#    NOTE: relies on the j / k axes being sequential ("arbitrary").
# ----------------------------------------------------------------------------
def _make_multi_proj_kernel(n_w, tk, num_k, apply_ln):
    def kernel(*refs):
        idx = 0
        x_ref = refs[idx]; idx += 1
        if apply_ln:
            g_ref = refs[idx]; idx += 1
        w_refs = refs[idx: idx + n_w]; idx += n_w
        o_refs = refs[idx: idx + n_w]; idx += n_w
        if apply_ln:
            xn_ref = refs[idx]; idx += 1
        if num_k > 1:
            acc_refs = refs[idx: idx + n_w]
        else:
            acc_refs = (None,) * n_w

        j = pl.program_id(1)
        k = pl.program_id(2)

        if apply_ln:
            @pl.when((j == 0) & (k == 0))
            def _():
                x = x_ref[...].astype(jnp.float32)
                g = g_ref[...].astype(jnp.float32)
                xn_ref[...] = _layer_norm_f32(x, g).astype(xn_ref.dtype)

            if num_k > 1:
                xk = xn_ref[:, pl.ds(pl.multiple_of(k * tk, tk), tk)]
            else:
                xk = xn_ref[...]
        else:
            # No-LN path: read the (K-tiled) input block directly, cast to bf16.
            xk = x_ref[...].astype(jnp.bfloat16)

        for w_ref, o_ref, acc_ref in zip(w_refs, o_refs, acc_refs):
            part = jnp.dot(xk, w_ref[...].astype(jnp.bfloat16),
                           preferred_element_type=jnp.float32)
            if num_k == 1:
                o_ref[...] = part.astype(o_ref.dtype)
            else:
                @pl.when(k == 0)
                def _(acc_ref=acc_ref):
                    acc_ref[...] = jnp.zeros_like(acc_ref)

                acc_ref[...] += part

                @pl.when(k == num_k - 1)
                def _(o_ref=o_ref, acc_ref=acc_ref):
                    o_ref[...] = acc_ref[...].astype(o_ref.dtype)

    return kernel


def fused_multi_proj(x, ws, gamma=None):
    """[LayerNorm(x) if gamma is not None else x] @ w_i for every w_i in ws.

    All weights must share the same (d, n) shape; returns one array per weight
    (or a single array when len(ws) == 1).
    """
    shape = x.shape
    d = shape[-1]
    rows = int(math.prod(shape[:-1])) if len(shape) > 1 else 1
    n = ws[0].shape[1]
    for w in ws:
        assert w.shape == (d, n)
    n_w = len(ws)
    apply_ln = gamma is not None

    x2 = x.reshape(rows, d)
    tr = _row_tile(rows, ROW_CAP_MM)
    tn = _col_tile(n, COL_CAP_MM)
    tk = _red_tile(d, K_CAP_MM)
    num_k = d // tk

    if apply_ln:
        x_spec = pl.BlockSpec((tr, d), lambda i, j, k: (i, 0))
    else:
        x_spec = pl.BlockSpec((tr, tk), lambda i, j, k: (i, k))

    in_specs = [x_spec]
    args = [x2]
    if apply_ln:
        in_specs.append(pl.BlockSpec((1, d), lambda i, j, k: (0, 0)))
        args.append(gamma.reshape(1, d))
    for w in ws:
        in_specs.append(pl.BlockSpec((tk, tn), lambda i, j, k: (k, j)))
        args.append(w)

    out_shape = tuple(jax.ShapeDtypeStruct((rows, n), x.dtype) for _ in ws)
    out_specs = tuple(pl.BlockSpec((tr, tn), lambda i, j, k: (i, j)) for _ in ws)

    scratch = []
    if apply_ln:
        scratch.append(pltpu.VMEM((tr, d), jnp.bfloat16))
    if num_k > 1:
        scratch.extend(pltpu.VMEM((tr, tn), jnp.float32) for _ in ws)

    outs = pl.pallas_call(
        _make_multi_proj_kernel(n_w, tk, num_k, apply_ln),
        out_shape=out_shape,
        grid_spec=pltpu.PrefetchScalarGridSpec(
            num_scalar_prefetch=0,
            grid=(pl.cdiv(rows, tr), pl.cdiv(n, tn), num_k),
            in_specs=in_specs,
            out_specs=out_specs,
            scratch_shapes=scratch,
        ),
        compiler_params=pltpu.CompilerParams(
            dimension_semantics=("parallel", "arbitrary", "arbitrary"),
            vmem_limit_bytes=VMEM_LIMIT,
        ),
    )(*args)

    outs = [o.reshape(*shape[:-1], n) for o in outs]
    return outs[0] if n_w == 1 else tuple(outs)


# ----------------------------------------------------------------------------
# 3) GEGLU + LayerNorm fused into the FF output projection
# ----------------------------------------------------------------------------
def _make_geglu_proj_kernel(tk, num_k):
    def kernel(*refs):
        if num_k > 1:
            a_ref, g_ref, gamma_ref, w_ref, o_ref, hn_ref, acc_ref = refs
        else:
            a_ref, g_ref, gamma_ref, w_ref, o_ref, hn_ref = refs
            acc_ref = None

        j = pl.program_id(1)
        k = pl.program_id(2)

        @pl.when((j == 0) & (k == 0))
        def _():
            a = a_ref[...].astype(jnp.float32)
            gate = g_ref[...].astype(jnp.float32)
            h = gate * _gelu_tanh(a)
            hn_ref[...] = _layer_norm_f32(
                h, gamma_ref[...].astype(jnp.float32)).astype(hn_ref.dtype)

        if num_k > 1:
            hk = hn_ref[:, pl.ds(pl.multiple_of(k * tk, tk), tk)]
        else:
            hk = hn_ref[...]

        part = jnp.dot(hk, w_ref[...].astype(jnp.bfloat16),
                       preferred_element_type=jnp.float32)
        if num_k == 1:
            o_ref[...] = part.astype(o_ref.dtype)
        else:
            @pl.when(k == 0)
            def _():
                acc_ref[...] = jnp.zeros_like(acc_ref)

            acc_ref[...] += part

            @pl.when(k == num_k - 1)
            def _():
                o_ref[...] = acc_ref[...].astype(o_ref.dtype)

    return kernel


def geglu_ln_proj(a, gate, gamma, w):
    """(gate * gelu(a)) -> LayerNorm -> @ w, all in one kernel."""
    shape = a.shape
    f = shape[-1]
    rows = int(math.prod(shape[:-1])) if len(shape) > 1 else 1
    n = w.shape[1]
    a2 = a.reshape(rows, f)
    g2 = gate.reshape(rows, f)
    tr = _row_tile(rows, ROW_CAP_MM)
    tn = _col_tile(n, COL_CAP_MM)
    tk = _red_tile(f, K_CAP_MM)
    num_k = f // tk

    scratch = [pltpu.VMEM((tr, f), jnp.bfloat16)]
    if num_k > 1:
        scratch.append(pltpu.VMEM((tr, tn), jnp.float32))

    out = pl.pallas_call(
        _make_geglu_proj_kernel(tk, num_k),
        out_shape=jax.ShapeDtypeStruct((rows, n), a.dtype),
        grid_spec=pltpu.PrefetchScalarGridSpec(
            num_scalar_prefetch=0,
            grid=(pl.cdiv(rows, tr), pl.cdiv(n, tn), num_k),
            in_specs=[
                pl.BlockSpec((tr, f), lambda i, j, k: (i, 0)),
                pl.BlockSpec((tr, f), lambda i, j, k: (i, 0)),
                pl.BlockSpec((1, f), lambda i, j, k: (0, 0)),
                pl.BlockSpec((tk, tn), lambda i, j, k: (k, j)),
            ],
            out_specs=pl.BlockSpec((tr, tn), lambda i, j, k: (i, j)),
            scratch_shapes=scratch,
        ),
        compiler_params=pltpu.CompilerParams(
            dimension_semantics=("parallel", "arbitrary", "arbitrary"),
            vmem_limit_bytes=VMEM_LIMIT,
        ),
    )(a2, g2, gamma.reshape(1, f), w)
    return out.reshape(*shape[:-1], n)


# ----------------------------------------------------------------------------
# 4) Attention core on the (b, n, heads*dim_head) projection layout.
#    Grid = (batch, head-group, query-block); each grid step handles
#    heads_per_block heads (lane-dense >=128-wide blocks when possible) and the
#    null KV token is folded into the softmax inside the kernel.
#    TODO(synk): for very long KV sequences, tile the KV axis flash-attention
#    style with running max/denominator instead of holding (tq, m) in VMEM.
# ----------------------------------------------------------------------------
def _heads_per_block(heads, dim_head):
    hg = max(1, 128 // dim_head)
    hg = min(hg, heads)
    while hg > 1 and heads % hg != 0:
        hg -= 1
    if (hg * dim_head) % 128 != 0:
        # Fall back to a full-width block (always a legal block shape).
        hg = heads
    return hg


def _make_attn_kernel(hg, dh):
    def kernel(q_ref, k_ref, v_ref, nk_ref, nv_ref, qs_ref, ks_ref, o_ref):
        qs = qs_ref[...].astype(jnp.float32)          # (1, dh)
        ks = ks_ref[...].astype(jnp.float32)          # (1, dh)
        q_all = q_ref[0].astype(jnp.float32)          # (tq, hg*dh)
        k_all = k_ref[0].astype(jnp.float32)          # (m,  hg*dh)
        v_all = v_ref[0]                              # (m,  hg*dh)
        nk_all = nk_ref[...].astype(jnp.float32)      # (1,  hg*dh)
        nv_all = nv_ref[...].astype(jnp.float32)      # (1,  hg*dh)

        outs = []
        for g in range(hg):
            c0 = g * dh
            c1 = c0 + dh
            # l2norm over the head dim (F.normalize) then learned scales.
            # NOTE: the module's `q * scale` before l2norm cancels exactly.
            q = _l2norm_f32(q_all[:, c0:c1]) * qs     # (tq, dh)
            k = _l2norm_f32(k_all[:, c0:c1]) * ks     # (m,  dh)
            nk = _l2norm_f32(nk_all[:, c0:c1]) * ks   # (1,  dh)
            nv = nv_all[:, c0:c1]                     # (1,  dh)
            v = v_all[:, c0:c1].astype(jnp.bfloat16)  # (m,  dh)

            sim = jax.lax.dot_general(
                q.astype(jnp.bfloat16), k.astype(jnp.bfloat16),
                (((1,), (1,)), ((), ())),
                preferred_element_type=jnp.float32) * ATTN_SCALE   # (tq, m)
            sim_n = jnp.sum(q * nk, axis=-1, keepdims=True) * ATTN_SCALE  # (tq, 1)

            mx = jnp.maximum(jnp.max(sim, axis=-1, keepdims=True), sim_n)
            p = jnp.exp(sim - mx)
            pn = jnp.exp(sim_n - mx)
            inv = pl.reciprocal(jnp.sum(p, axis=-1, keepdims=True) + pn,
                                approx=True)
            acc = jnp.dot(p.astype(jnp.bfloat16), v,
                          preferred_element_type=jnp.float32)      # (tq, dh)
            acc = acc + pn * nv
            outs.append(acc * inv)

        out = outs[0] if hg == 1 else jnp.concatenate(outs, axis=-1)
        o_ref[0] = out.astype(o_ref.dtype)

    return kernel


def attn_core(q, k, v, null_k, null_v, q_scale, k_scale, *, heads, dim_head):
    b, n, inner = q.shape
    m = k.shape[1]
    dh = dim_head
    hg = _heads_per_block(heads, dim_head)
    wg = hg * dh
    ng = heads // hg
    tq = n if n <= TQ_CAP else TQ_CAP

    return pl.pallas_call(
        _make_attn_kernel(hg, dh),
        out_shape=jax.ShapeDtypeStruct((b, n, inner), q.dtype),
        grid_spec=pltpu.PrefetchScalarGridSpec(
            num_scalar_prefetch=0,
            grid=(b, ng, pl.cdiv(n, tq)),
            in_specs=[
                pl.BlockSpec((1, tq, wg), lambda bi, hi, qi: (bi, qi, hi)),
                pl.BlockSpec((1, m, wg), lambda bi, hi, qi: (bi, 0, hi)),
                pl.BlockSpec((1, m, wg), lambda bi, hi, qi: (bi, 0, hi)),
                pl.BlockSpec((1, wg), lambda bi, hi, qi: (0, hi)),
                pl.BlockSpec((1, wg), lambda bi, hi, qi: (0, hi)),
                pl.BlockSpec((1, dh), lambda bi, hi, qi: (0, 0)),
                pl.BlockSpec((1, dh), lambda bi, hi, qi: (0, 0)),
            ],
            out_specs=pl.BlockSpec((1, tq, wg), lambda bi, hi, qi: (bi, qi, hi)),
        ),
        compiler_params=pltpu.CompilerParams(
            dimension_semantics=("parallel", "parallel", "parallel"),
            vmem_limit_bytes=VMEM_LIMIT,
        ),
    )(q, k, v, null_k, null_v, q_scale, k_scale)


# ----------------------------------------------------------------------------
# Module-level forward (Pallas path)
# ----------------------------------------------------------------------------
def attention(x, p, *, heads, dim_head, context=None):
    inner = heads * dim_head
    cross = context is not None
    if cross:
        # LN fused into the Q projection; K/V come from the *un-normalized*
        # context (as in the reference module) and are computed in one call.
        q = fused_multi_proj(x, [p["wq"]], gamma=p["norm_gamma"])
        k, v = fused_multi_proj(context, [p["wk"], p["wv"]])
    else:
        # Q/K/V in ONE fused call: x read once, LayerNorm computed once.
        q, k, v = fused_multi_proj(x, [p["wq"], p["wk"], p["wv"]],
                                   gamma=p["norm_gamma"])

    nk = p["null_k"].reshape(1, inner).astype(x.dtype)
    nv = p["null_v"].reshape(1, inner).astype(x.dtype)
    out = attn_core(q, k, v, nk, nv,
                    p["q_scale"].reshape(1, dim_head),
                    p["k_scale"].reshape(1, dim_head),
                    heads=heads, dim_head=dim_head)
    return fused_multi_proj(out, [p["wo"]])


def feed_forward(x, p):
    # Both GEGLU branches in one fused LN+proj call.
    a, gate = fused_multi_proj(x, [p["w1a"], p["w1b"]], gamma=p["norm1_gamma"])
    return geglu_ln_proj(a, gate, p["norm2_gamma"], p["w2"])


def transformer_blocks_forward(x, params, *, heads, dim_head,
                               context=None, context_mask=None, attn_bias=None):
    # TODO(synk): attn_bias / context_mask require a GPTConfig (cfg) to slice and
    # are not exercised here; additive-bias / mask support is not implemented in
    # the Pallas attention kernel.
    assert attn_bias is None and context_mask is None
    for layer in params["layers"]:
        x = attention(x, layer["attn"], heads=heads, dim_head=dim_head) + x
        x = attention(x, layer["cross"], heads=heads, dim_head=dim_head,
                      context=context) + x
        x = feed_forward(x, layer["ff"]) + x
    return layer_norm(x, params["final_gamma"])


# ----------------------------------------------------------------------------
# Parameters + plain-JAX reference (mirrors the PyTorch module op-for-op)
# ----------------------------------------------------------------------------
def init_params(key, *, dim, depth, dim_head, heads, ff_mult=4):
    inner = dim_head * heads
    ff_inner = int(dim * ff_mult * 2 / 3)

    def dense(k, fan_in, fan_out):
        return jax.random.normal(k, (fan_in, fan_out), jnp.float32) / math.sqrt(fan_in)

    def make_attn(k):
        ks = jax.random.split(k, 6)
        return {
            "norm_gamma": jnp.ones((dim,), jnp.float32),
            "wq": dense(ks[0], dim, inner),
            "wk": dense(ks[1], dim, inner),   # to_kv first half
            "wv": dense(ks[2], dim, inner),   # to_kv second half
            "wo": dense(ks[3], inner, dim),
            "null_k": jax.random.normal(ks[4], (heads, 1, dim_head), jnp.float32),
            "null_v": jax.random.normal(ks[5], (heads, 1, dim_head), jnp.float32),
            "q_scale": jnp.ones((dim_head,), jnp.float32),
            "k_scale": jnp.ones((dim_head,), jnp.float32),
        }

    def make_ff(k):
        ks = jax.random.split(k, 3)
        return {
            "norm1_gamma": jnp.ones((dim,), jnp.float32),
            "w1a": dense(ks[0], dim, ff_inner),   # GEGLU "x" half
            "w1b": dense(ks[1], dim, ff_inner),   # GEGLU "gate" half
            "norm2_gamma": jnp.ones((ff_inner,), jnp.float32),
            "w2": dense(ks[2], ff_inner, dim),
        }

    layers = []
    keys = jax.random.split(key, 3 * depth)
    for i in range(depth):
        layers.append({
            "attn": make_attn(keys[3 * i]),
            "cross": make_attn(keys[3 * i + 1]),
            "ff": make_ff(keys[3 * i + 2]),
        })
    return {"layers": layers, "final_gamma": jnp.ones((dim,), jnp.float32)}


def _l2norm_ref(t):
    return t * jax.lax.rsqrt(
        jnp.maximum(jnp.sum(t * t, axis=-1, keepdims=True),
                    L2NORM_EPS * L2NORM_EPS))


def _layer_norm_ref(x, gamma):
    mean = jnp.mean(x, axis=-1, keepdims=True)
    var = jnp.mean((x - mean) ** 2, axis=-1, keepdims=True)
    return (x - mean) * jax.lax.rsqrt(var + EPS) * gamma


def _attention_ref(x, p, *, heads, dim_head, context=None):
    b, n, _ = x.shape
    xn = _layer_norm_ref(x, p["norm_gamma"])
    kv_in = context if context is not None else xn
    q = (xn @ p["wq"]) * ATTN_SCALE
    k = kv_in @ p["wk"]
    v = kv_in @ p["wv"]

    def split_heads(t):
        bb, nn, _ = t.shape
        return t.reshape(bb, nn, heads, dim_head).transpose(0, 2, 1, 3)

    q, k, v = split_heads(q), split_heads(k), split_heads(v)
    nk = jnp.broadcast_to(p["null_k"][None], (b, heads, 1, dim_head))
    nv = jnp.broadcast_to(p["null_v"][None], (b, heads, 1, dim_head))
    k = jnp.concatenate([nk, k], axis=2)
    v = jnp.concatenate([nv, v], axis=2)
    q, k = _l2norm_ref(q), _l2norm_ref(k)
    q = q * p["q_scale"]
    k = k * p["k_scale"]
    sim = jnp.einsum("bhid,bhjd->bhij", q, k) * ATTN_SCALE
    attn = jax.nn.softmax(sim, axis=-1)
    out = jnp.einsum("bhij,bhjd->bhid", attn, v)
    out = out.transpose(0, 2, 1, 3).reshape(b, n, heads * dim_head)
    return out @ p["wo"]


def _feed_forward_ref(x, p):
    xn = _layer_norm_ref(x, p["norm1_gamma"])
    a = xn @ p["w1a"]
    gate = xn @ p["w1b"]
    h = gate * _gelu_tanh(a)
    return _layer_norm_ref(h, p["norm2_gamma"]) @ p["w2"]


def reference_forward(x, params, *, heads, dim_head, context=None):
    for layer in params["layers"]:
        x = _attention_ref(x, layer["attn"], heads=heads, dim_head=dim_head) + x
        x = _attention_ref(x, layer["cross"], heads=heads, dim_head=dim_head,
                           context=context) + x
        x = _feed_forward_ref(x, layer["ff"]) + x
    return _layer_norm_ref(x, params["final_gamma"])


if __name__ == "__main__":
    key = jax.random.PRNGKey(0)
    kx, kc, kp = jax.random.split(key, 3)

    # Small shapes: batch=2, seq=8, context_seq=6, dim=32, heads=2,
    # dim_head=64 (module default), depth=2, ff_mult=4 (ff inner dim = 85).
    B, S, SC, D = 2, 8, 6, 32
    HEADS, DIM_HEAD, DEPTH = 2, 64, 2

    x = jax.random.normal(kx, (B, S, D), dtype=jnp.float32)
    context = jax.random.normal(kc, (B, SC, D), dtype=jnp.float32)
    params = init_params(kp, dim=D, depth=DEPTH, dim_head=DIM_HEAD,
                         heads=HEADS, ff_mult=4)

    y = transformer_blocks_forward(x, params, heads=HEADS, dim_head=DIM_HEAD,
                                   context=context)
    y = jax.block_until_ready(y)
    assert y.shape == x.shape

    ref = reference_forward(x, params, heads=HEADS, dim_head=DIM_HEAD,
                            context=context)
    # Tolerance covers the kernel's intentional bf16 MXU feeding (f32 accumulate)
    # vs whatever default f32 dot precision XLA uses in the plain-JAX reference.
    max_err = float(jnp.max(jnp.abs(y - ref)))
    assert max_err < 1e-1, f"mismatch vs reference: max abs err {max_err}"

    print("KERNEL_OK")
</pallas_src>

<mosaic_0001>
module attributes {stable_mosaic.version = 11 : i64} {
  func.func @kernel(%arg0: i32, %arg1: i32, %arg2: i32, %arg3: memref<16x32xf32, #tpu.memory_space<vmem>>, %arg4: memref<1x32xf32, #tpu.memory_space<vmem>>, %arg5: memref<32x128xf32, #tpu.memory_space<vmem>>, %arg6: memref<32x128xf32, #tpu.memory_space<vmem>>, %arg7: memref<32x128xf32, #tpu.memory_space<vmem>>, %arg8: memref<16x128xf32, #tpu.memory_space<vmem>>, %arg9: memref<16x128xf32, #tpu.memory_space<vmem>>, %arg10: memref<16x128xf32, #tpu.memory_space<vmem>>, %arg11: memref<16x32xbf16, #tpu.memory_space<vmem>>) attributes {dimension_semantics = [#tpu.dimension_semantics<parallel>, #tpu.dimension_semantics<arbitrary>, #tpu.dimension_semantics<arbitrary>], iteration_bounds = array<i64: 1, 1, 1>, scalar_prefetch = 0 : i64, scratch_operands = 1 : i64, tpu.core_type = #tpu.core_type<tc>, window_params = [{transform_indices = @transform_0, window_bounds = array<i64: 16, 32>}, {pipeline_mode = #tpu.pipeline_mode<synchronous>, transform_indices = @transform_1, window_bounds = array<i64: 1, 32>}, {transform_indices = @transform_2, window_bounds = array<i64: 32, 128>}, {transform_indices = @transform_3, window_bounds = array<i64: 32, 128>}, {transform_indices = @transform_4, window_bounds = array<i64: 32, 128>}, {transform_indices = @transform_5, window_bounds = array<i64: 16, 128>}, {transform_indices = @transform_6, window_bounds = array<i64: 16, 128>}, {transform_indices = @transform_7, window_bounds = array<i64: 16, 128>}]} {
    %c0_i32 = arith.constant 0 : i32
    %0 = arith.cmpi eq, %arg1, %c0_i32 : i32
    %c0_i32_0 = arith.constant 0 : i32
    %1 = arith.cmpi eq, %arg2, %c0_i32_0 : i32
    %2 = arith.andi %0, %1 : i1
    %3 = arith.extui %2 : i1 to i32
    %c0_i32_1 = arith.constant 0 : i32
    %4 = arith.cmpi ne, %3, %c0_i32_1 : i32
    scf.if %4 {
      %c0_17 = arith.constant 0 : index
      %c0_18 = arith.constant 0 : index
      %18 = vector.load %arg3[%c0_17, %c0_18] : memref<16x32xf32, #tpu.memory_space<vmem>>, vector<16x32xf32>
      %c0_19 = arith.constant 0 : index
      %c0_20 = arith.constant 0 : index
      %19 = vector.load %arg4[%c0_19, %c0_20] : memref<1x32xf32, #tpu.memory_space<vmem>>, vector<1x32xf32>
      %cst_21 = arith.constant dense<0.000000e+00> : vector<16xf32>
      %20 = vector.multi_reduction <add>, %18, %cst_21 [1] : vector<16x32xf32> to vector<16xf32>
      %21 = vector.shape_cast %20 : vector<16xf32> to vector<16x1xf32>
      %cst_22 = arith.constant 3.200000e+01 : f32
      %22 = vector.broadcast %cst_22 : f32 to vector<16x1xf32>
      %23 = arith.divf %21, %22 : vector<16x1xf32>
      %24 = vector.broadcast %23 : vector<16x1xf32> to vector<16x32xf32>
      %25 = arith.subf %18, %24 : vector<16x32xf32>
      %26 = arith.mulf %25, %25 : vector<16x32xf32>
      %cst_23 = arith.constant dense<0.000000e+00> : vector<16xf32>
      %27 = vector.multi_reduction <add>, %26, %cst_23 [1] : vector<16x32xf32> to vector<16xf32>
      %28 = vector.shape_cast %27 : vector<16xf32> to vector<16x1xf32>
      %cst_24 = arith.constant 3.200000e+01 : f32
      %29 = vector.broadcast %cst_24 : f32 to vector<16x1xf32>
      %30 = arith.divf %28, %29 : vector<16x1xf32>
      %cst_25 = arith.constant 9.99999974E-6 : f32
      %31 = vector.broadcast %cst_25 : f32 to vector<16x1xf32>
      %32 = arith.addf %30, %31 : vector<16x1xf32>
      %33 = math.rsqrt %32 : vector<16x1xf32>
      %34 = vector.broadcast %33 : vector<16x1xf32> to vector<16x32xf32>
      %35 = arith.mulf %25, %34 : vector<16x32xf32>
      %36 = vector.broadcast %19 : vector<1x32xf32> to vector<16x32xf32>
      %37 = arith.mulf %35, %36 : vector<16x32xf32>
      %38 = arith.truncf %37 : vector<16x32xf32> to vector<16x32xbf16>
      %c0_26 = arith.constant 0 : index
      %c0_27 = arith.constant 0 : index
      %39 = vector.load %arg11[%c0_26, %c0_27] : memref<16x32xbf16, #tpu.memory_space<vmem>>, vector<16x32xbf16>
      tpu.vector_store %arg11[%c0_26, %c0_27], %38 {strides = array<i32>} : memref<16x32xbf16, #tpu.memory_space<vmem>>, vector<16x32xbf16>,
    } else {
    }
    %c0 = arith.constant 0 : index
    %c0_2 = arith.constant 0 : index
    %5 = vector.load %arg11[%c0, %c0_2] : memref<16x32xbf16, #tpu.memory_space<vmem>>, vector<16x32xbf16>
    %c0_3 = arith.constant 0 : index
    %c0_4 = arith.constant 0 : index
    %6 = vector.load %arg5[%c0_3, %c0_4] : memref<32x128xf32, #tpu.memory_space<vmem>>, vector<32x128xf32>
    %7 = arith.truncf %6 : vector<32x128xf32> to vector<32x128xbf16>
    %cst = arith.constant dense<0.000000e+00> : vector<16x128xf32>
    %8 = tpu.matmul %5, %7, %cst {dimension_numbers = #tpu.dot_dimension_numbers<[1], [0], [0], [1], [0, 0, 1, 1], [], []>} : vector<16x32xbf16>, vector<32x128xbf16>, vector<16x128xf32> -> vector<16x128xf32>
    %c0_5 = arith.constant 0 : index
    %c0_6 = arith.constant 0 : index
    %9 = vector.load %arg8[%c0_5, %c0_6] : memref<16x128xf32, #tpu.memory_space<vmem>>, vector<16x128xf32>
    tpu.vector_store %arg8[%c0_5, %c0_6], %8 {strides = array<i32>} : memref<16x128xf32, #tpu.memory_space<vmem>>, vector<16x128xf32>,
    %c0_7 = arith.constant 0 : index
    %c0_8 = arith.constant 0 : index
    %10 = vector.load %arg6[%c0_7, %c0_8] : memref<32x128xf32, #tpu.memory_space<vmem>>, vector<32x128xf32>
    %11 = arith.truncf %10 : vector<32x128xf32> to vector<32x128xbf16>
    %cst_9 = arith.constant dense<0.000000e+00> : vector<16x128xf32>
    %12 = tpu.matmul %5, %11, %cst_9 {dimension_numbers = #tpu.dot_dimension_numbers<[1], [0], [0], [1], [0, 0, 1, 1], [], []>} : vector<16x32xbf16>, vector<32x128xbf16>, vector<16x128xf32> -> vector<16x128xf32>
    %c0_10 = arith.constant 0 : index
    %c0_11 = arith.constant 0 : index
    %13 = vector.load %arg9[%c0_10, %c0_11] : memref<16x128xf32, #tpu.memory_space<vmem>>, vector<16x128xf32>
    tpu.vector_store %arg9[%c0_10, %c0_11], %12 {strides = array<i32>} : memref<16x128xf32, #tpu.memory_space<vmem>>, vector<16x128xf32>,
    %c0_12 = arith.constant 0 : index
    %c0_13 = arith.constant 0 : index
    %14 = vector.load %arg7[%c0_12, %c0_13] : memref<32x128xf32, #tpu.memory_space<vmem>>, vector<32x128xf32>
    %15 = arith.truncf %14 : vector<32x128xf32> to vector<32x128xbf16>
    %cst_14 = arith.constant dense<0.000000e+00> : vector<16x128xf32>
    %16 = tpu.matmul %5, %15, %cst_14 {dimension_numbers = #tpu.dot_dimension_numbers<[1], [0], [0], [1], [0, 0, 1, 1], [], []>} : vector<16x32xbf16>, vector<32x128xbf16>, vector<16x128xf32> -> vector<16x128xf32>
    %c0_15 = arith.constant 0 : index
    %c0_16 = arith.constant 0 : index
    %17 = vector.load %arg10[%c0_15, %c0_16] : memref<16x128xf32, #tpu.memory_space<vmem>>, vector<16x128xf32>
    tpu.vector_store %arg10[%c0_15, %c0_16], %16 {strides = array<i32>} : memref<16x128xf32, #tpu.memory_space<vmem>>, vector<16x128xf32>,
    return
  }
  func.func @transform_0(%arg0: i32, %arg1: i32, %arg2: i32) -> (i32, i32) {
    %c0_i32 = arith.constant 0 : i32
    %c0_i32_0 = arith.constant 0 : i32
    return %arg0, %c0_i32 : i32, i32
  }
  func.func @transform_1(%arg0: i32, %arg1: i32, %arg2: i32) -> (i32, i32) {
    %c0_i32 = arith.constant 0 : i32
    %c0_i32_0 = arith.constant 0 : i32
    %c0_i32_1 = arith.constant 0 : i32
    return %c0_i32, %c0_i32_0 : i32, i32
  }
  func.func @transform_2(%arg0: i32, %arg1: i32, %arg2: i32) -> (i32, i32) {
    %c0_i32 = arith.constant 0 : i32
    return %arg2, %arg1 : i32, i32
  }
  func.func @transform_3(%arg0: i32, %arg1: i32, %arg2: i32) -> (i32, i32) {
    %c0_i32 = arith.constant 0 : i32
    return %arg2, %arg1 : i32, i32
  }
  func.func @transform_4(%arg0: i32, %arg1: i32, %arg2: i32) -> (i32, i32) {
    %c0_i32 = arith.constant 0 : i32
    return %arg2, %arg1 : i32, i32
  }
  func.func @transform_5(%arg0: i32, %arg1: i32, %arg2: i32) -> (i32, i32) {
    %c0_i32 = arith.constant 0 : i32
    return %arg0, %arg1 : i32, i32
  }
  func.func @transform_6(%arg0: i32, %arg1: i32, %arg2: i32) -> (i32, i32) {
    %c0_i32 = arith.constant 0 : i32
    return %arg0, %arg1 : i32, i32
  }
  func.func @transform_7(%arg0: i32, %arg1: i32, %arg2: i32) -> (i32, i32) {
    %c0_i32 = arith.constant 0 : i32
    return %arg0, %arg1 : i32, i32
  }
}

</mosaic_0001>

<llo_original>
// kernel: tpu_custom_call.1
$region0: #{tpu_custom_call.1}
  #allocation0 [shape = 'u32[]', space=smem, size = 0x4, offset = 0x4, fixed_abs, tag = 'smem constant byte address 0x4 - core index']
  #allocation1 [shape = 'u32[144,128]{1,0:T(1,128)}', space=vmem, size = 0x12000, scoped, tag = 'internal scratch']
  #allocation2 [shape = 'bf16[16,32]{1,0:T(8,128)(2,1)}', space=vmem, size = 0x1000, scoped, tag = 'scratch operand']
  %s0 = inlined_call_operand.hbm [shape: f32[16,32], index: 0, kind: input, shape index: {}]
  %s1 = inlined_call_operand.vmem [shape: f32[1,32], index: 1, kind: input, shape index: {}]
  %s2 = inlined_call_operand.hbm [shape: f32[32,128], index: 2, kind: input, shape index: {}]
  %s3 = inlined_call_operand.hbm [shape: f32[32,128], index: 3, kind: input, shape index: {}]
  %s4 = inlined_call_operand.hbm [shape: f32[32,128], index: 4, kind: input, shape index: {}]
  %s5 = inlined_call_operand.hbm [shape: f32[16,128], index: 5, kind: output, shape index: {0}]
  %s6 = inlined_call_operand.hbm [shape: f32[16,128], index: 6, kind: output, shape index: {1}]
  %s7 = inlined_call_operand.hbm [shape: f32[16,128], index: 7, kind: output, shape index: {2}]
  %8 = xla_tuple %s5, %s6, %s7
  %s9 = sld [smem:[#allocation0]]
  $region66: #{tpu_custom_call.1} parent=0
    _
  %s11 = ssub.s32 1, %s9
  %s12 = scalar_select 0, %s11, %s9
  $region1: #{tpu_custom_call.1} parent=0
    #allocation3 [shape = 'u8[8192]{0}', space=vmem, size = 0x2000, scoped, tag = 'input window, operand 0, single buffered']
    #allocation4 [shape = 's32[1]{0}', space=sflag, size = 0x4, scoped, tag = 'scoped memory for tpu_custom_call.1']
    #allocation5 [shape = 's32[1]{0}', space=sflag, size = 0x4, scoped, tag = 'scoped memory for tpu_custom_call.1']
    #allocation6 [shape = 'u8[16384]{0}', space=vmem, size = 0x4000, scoped, tag = 'input window, operand 2, single buffered']
    #allocation7 [shape = 's32[1]{0}', space=sflag, size = 0x4, scoped, tag = 'scoped memory for tpu_custom_call.1']
    #allocation8 [shape = 'u8[16384]{0}', space=vmem, size = 0x4000, scoped, tag = 'input window, operand 3, single buffered']
    #allocation9 [shape = 'u8[16384]{0}', space=vmem, size = 0x4000, scoped, tag = 'input window, operand 4, single buffered']
    #allocation10 [shape = 's32[1]{0}', space=sflag, size = 0x4, scoped, tag = 'scoped memory for tpu_custom_call.1']
    #allocation11 [shape = 'u8[8192]{0}', space=vmem, size = 0x2000, scoped, tag = 'output window, operand 0, single buffered']
    #allocation12 [shape = 'u8[8192]{0}', space=vmem, size = 0x2000, scoped, tag = 'output window, operand 1, single buffered']
    #allocation13 [shape = 's32[1]{0}', space=sflag, size = 0x4, scoped, tag = 'scoped memory for tpu_custom_call.1']
    #allocation14 [shape = 'u8[8192]{0}', space=vmem, size = 0x2000, scoped, tag = 'output window, operand 2, single buffered']
    %13 = vsyncpa [#allocation4], 0
    %14 = vsyncpa [#allocation7], 0
    %15 = vsyncpa [#allocation10], 0
    %16 = vsyncpa [#allocation5], 0
    %17 = vsyncpa [#allocation13], 0
    // Predicated region
    $region2: #{tpu_custom_call.1} parent=1 // pred_check
      _
    $region3: #{tpu_custom_call.1} parent=1 // pred_check_branch
      %19 = sbr.rel (0) target = $region5
    $region4: #{tpu_custom_call.1} parent=1 // pred_region
      %s21 = ssub.s32 256, 256
      %22 = vsyncadd [#allocation4], %s21
      %s23 = sshll.u32 [#allocation3], 4
      %s24 = int_to_ptr.vmem [resolvable:$true] %s23
      %29 = dma.hbm_to_vmem [thread:$0]  %s0, 256, %s24, [#allocation4], 128, 128, 8
    $region5: #{tpu_custom_call.1} parent=1 // pred_fallthru
      _
    // Predicated region
    $region6: #{tpu_custom_call.1} parent=1 // pred_check
      _
    $region7: #{tpu_custom_call.1} parent=1 // pred_check_branch
      %31 = sbr.rel (0) target = $region9
    $region8: #{tpu_custom_call.1} parent=1 // pred_region
      _
    $region9: #{tpu_custom_call.1} parent=1 // pred_fallthru
      _
    // Predicated region
    $region10: #{tpu_custom_call.1} parent=1 // pred_check
      _
    $region11: #{tpu_custom_call.1} parent=1 // pred_check_branch
      %33 = sbr.rel (0) target = $region13
    $region12: #{tpu_custom_call.1} parent=1 // pred_region
      %s35 = ssub.s32 512, 512
      %36 = vsyncadd [#allocation7], %s35
      %s37 = sshll.u32 [#allocation6], 4
      %s38 = int_to_ptr.vmem [resolvable:$true] %s37
      %43 = dma.hbm_to_vmem [thread:$0]  %s2, 512, %s38, [#allocation7], 128, 128, 8
    $region13: #{tpu_custom_call.1} parent=1 // pred_fallthru
      _
    // Predicated region
    $region14: #{tpu_custom_call.1} parent=1 // pred_check
      _
    $region15: #{tpu_custom_call.1} parent=1 // pred_check_branch
      %45 = sbr.rel (0) target = $region17
    $region16: #{tpu_custom_call.1} parent=1 // pred_region
      %s47 = ssub.s32 512, 512
      %48 = vsyncadd [#allocation7], %s47
      %s49 = sshll.u32 [#allocation8], 4
      %s50 = int_to_ptr.vmem [resolvable:$true] %s49
      %55 = dma.hbm_to_vmem [thread:$0]  %s3, 512, %s50, [#allocation7], 128, 128, 8
    $region17: #{tpu_custom_call.1} parent=1 // pred_fallthru
      _
    // Predicated region
    $region18: #{tpu_custom_call.1} parent=1 // pred_check
      _
    $region19: #{tpu_custom_call.1} parent=1 // pred_check_branch
      %57 = sbr.rel (0) target = $region21
    $region20: #{tpu_custom_call.1} parent=1 // pred_region
      %s59 = ssub.s32 512, 512
      %60 = vsyncadd [#allocation10], %s59
      %s61 = sshll.u32 [#allocation9], 4
      %s62 = int_to_ptr.vmem [resolvable:$true] %s61
      %67 = dma.hbm_to_vmem [thread:$0]  %s4, 512, %s62, [#allocation10], 128, 128, 8
    $region21: #{tpu_custom_call.1} parent=1 // pred_fallthru
      _
    // Predicated region
    $region22: #{tpu_custom_call.1} parent=1 // pred_check
      _
    $region23: #{tpu_custom_call.1} parent=1 // pred_check_branch
      %69 = sbr.rel (0) target = $region25
    $region24: #{tpu_custom_call.1} parent=1 // pred_region
      %70 = dma.done [#allocation4], 256
    $region25: #{tpu_custom_call.1} parent=1 // pred_fallthru
      _
    // Predicated region
    $region26: #{tpu_custom_call.1} parent=1 // pred_check
      _
    $region27: #{tpu_custom_call.1} parent=1 // pred_check_branch
      %72 = sbr.rel (0) target = $region29
    $region28: #{tpu_custom_call.1} parent=1 // pred_region
      %73 = dma.done [#allocation7], 512
    $region29: #{tpu_custom_call.1} parent=1 // pred_fallthru
      _
    // Predicated region
    $region30: #{tpu_custom_call.1} parent=1 // pred_check
      _
    $region31: #{tpu_custom_call.1} parent=1 // pred_check_branch
      %75 = sbr.rel (0) target = $region33
    $region32: #{tpu_custom_call.1} parent=1 // pred_region
      %76 = dma.done [#allocation7], 512
    $region33: #{tpu_custom_call.1} parent=1 // pred_fallthru
      _
    // Predicated region
    $region34: #{tpu_custom_call.1} parent=1 // pred_check
      _
    $region35: #{tpu_custom_call.1} parent=1 // pred_check_branch
      %78 = sbr.rel (0) target = $region37
    $region36: #{tpu_custom_call.1} parent=1 // pred_region
      %79 = dma.done [#allocation10], 512
    $region37: #{tpu_custom_call.1} parent=1 // pred_fallthru
      _
    %p81 = scmp.eq.s32.totalorder 0, 0
    %p82 = scmp.eq.s32.totalorder 0, 0
    %p83 = pnand %p81, %p82
    %p84 = pneg %p83
    // Predicated region
    $region38: #{tpu_custom_call.1} parent=1 // pred_check
      _
    $region39: #{tpu_custom_call.1} parent=1 // pred_check_branch
      %86 = sbr.rel (%p83) target = $region41
    $region40: #{tpu_custom_call.1} parent=1 // pred_region
      %v87 = vld [vmem:[#allocation3] sm:$0xff]
      %v88 = vld [vmem:[#allocation3 + $0x8] sm:$0xff]
      %v89 = vld [vmem:[%s1] sm:$0x1]
      %vm90 = vcmask 261120
      %v91 = vsel %vm90, %v87, 0.0
      %92 = vadd.xlane.f32.xlu0 %v91
      %v93 = vpop.xlane.xlu0 %92
      %v94 = vsel %vm90, %v88, 0.0
      %95 = vadd.xlane.f32.xlu0 %v94
      %v96 = vpop.xlane.xlu0 %95
      %v97 = vrcp.pop 32.0
      %v98 = vmul.f32 %v93, %v97
      %v99 = vmul.f32 %v96, %v97
      %v100 = vsub.f32 %v87, %v98
      %v101 = vsub.f32 %v88, %v99
      %v102 = vmul.f32 %v100, %v100
      %v103 = vmul.f32 %v101, %v101
      %v104 = vsel %vm90, %v102, 0.0
      %105 = vadd.xlane.f32.xlu0 %v104
      %v106 = vpop.xlane.xlu0 %105
      %v107 = vsel %vm90, %v103, 0.0
      %108 = vadd.xlane.f32.xlu0 %v107
      %v109 = vpop.xlane.xlu0 %108
      %v110 = vmul.f32 %v106, %v97
      %v111 = vmul.f32 %v109, %v97
      %v112 = vadd.f32 %v110, 1e-05
      %v113 = vadd.f32 %v111, 1e-05
      %v114 = vrsqrt.pop %v112
      %v115 = vrsqrt.pop %v113
      %v116 = vmul.f32 %v100, %v114
      %v117 = vmul.f32 %v101, %v115
      %v119 = vlaneseq
      %v120 = vshrl.u32 %v119, 7
      %v121 = vsub.s32 0, %v120
      %v122 = vrot.slane %v89, %v121
      %v124 = vmul.f32 %v116, %v122
      %v125 = vmul.f32 %v117, %v122
      %v126 = vpack.c.bf16 %v125, %v124
      %v128 = vunpack.c.l.b16 %v126
      %v129 = vunpack.c.h.b16 %v126
      %v130 = vpack.c.b16 %v128, %v128
      %v131 = vpack.c.b16 %v129, %v129
      %vm134 = vcmask 257024
      %135 = vst.msk [vmem:[#allocation2] sm:$0xf] %vm134, %v130
      %136 = vst.msk [vmem:[#allocation2 + $0x4] sm:$0xf] %vm134, %v131
    $region41: #{tpu_custom_call.1} parent=1 // pred_fallthru
      _
    %v137 = vld [vmem:[#allocation2] sm:$0xf]
    %v138 = vld [vmem:[#allocation2 + $0x4] sm:$0xf]
    %v139 = vld [vmem:[#allocation6] sm:$0xff]
    %v140 = vld [vmem:[#allocation6 + $0x8] sm:$0xff]
    %v141 = vld [vmem:[#allocation6 + $0x10] sm:$0xff]
    %v142 = vld [vmem:[#allocation6 + $0x18] sm:$0xff]
    %v143 = vpack.c.bf16 %v140, %v139
    %v144 = vpack.c.bf16 %v142, %v141
    %v147 = vunpack.c.l.b16 %v137
    %v148 = vunpack.c.l.b16 %v138
    %v149 = vpack.c.b16 %v148, %v147
    %vm150 = vcmask 261120
    %v152 = vsel %vm150, %v149, 0
    %154 = vmatprep.subr.bf16.mxu0 0
    %155 = vmatpush1.bf16.msra.mxu0 0
    %156 = vmatprep.subr.bf16.mxu0 0
    %157 = vmatpush1.bf16.msra.mxu0 0
    %158 = vmatprep.subr.bf16.mxu0 0
    %159 = vmatpush1.bf16.msra.mxu0 0
    %160 = vmatprep.subr.bf16.mxu0 0
    %161 = vmatpush1.bf16.msra.mxu0 0
    %162 = vmatprep.subr.bf16.mxu0 0
    %163 = vmatpush1.bf16.msra.mxu0 0
    %164 = vmatprep.subr.bf16.mxu0 0
    %165 = vmatpush1.bf16.msra.mxu0 0
    %166 = vmatprep.subr.bf16.mxu0 0
    %167 = vmatpush1.bf16.msra.mxu0 %v144
    %168 = vmatprep.subr.bf16.mxu0 0
    %169 = vmatpush1.bf16.msra.mxu0 %v143
    %170 = vmatprep.subr.bf16.mxu0 0
    %171 = vmatpush2.bf16.msra.mxu0 0
    %172 = vmatprep.subr.bf16.mxu0 0
    %173 = vmatpush2.bf16.msra.mxu0 0
    %174 = vmatprep.subr.bf16.mxu0 0
    %175 = vmatpush2.bf16.msra.mxu0 0
    %176 = vmatprep.subr.bf16.mxu0 0
    %177 = vmatpush2.bf16.msra.mxu0 0
    %178 = vmatprep.subr.bf16.mxu0 0
    %179 = vmatpush2.bf16.msra.mxu0 0
    %180 = vmatprep.subr.bf16.mxu0 0
    %181 = vmatpush2.bf16.msra.mxu0 0
    %182 = vmatprep.subr.bf16.mxu0 0
    %183 = vmatpush2.bf16.msra.mxu0 0
    %184 = vmatprep.subr.bf16.mxu0 0
    %185 = vmatpush2.bf16.msra.mxu0 0
    %186 = vmatprep.mubr.bf16.mxu0 0
    %187 = vmatmul.mubr.bf16.gmra.mxu0 %v152
    %v188 = vpop.f32.mrf.mxu0
    %v189 = vadd.f32 0.0, %v188
    %v190 = vpop.f32.mrf.mxu0
    %v191 = vpop.f32.mrf.mxu0
    %v192 = vadd.f32 0.0, %v191
    %v193 = vpop.f32.mrf.mxu0
    %194 = vdwg.mxu0
    %195 = vst [vmem:[#allocation11] sm:$0xff] %v189
    %196 = vst [vmem:[#allocation11 + $0x8] sm:$0xff] %v192
    %v197 = vld [vmem:[#allocation8] sm:$0xff]
    %v198 = vld [vmem:[#allocation8 + $0x8] sm:$0xff]
    %v199 = vld [vmem:[#allocation8 + $0x10] sm:$0xff]
    %v200 = vld [vmem:[#allocation8 + $0x18] sm:$0xff]
    %v201 = vpack.c.bf16 %v198, %v197
    %v202 = vpack.c.bf16 %v200, %v199
    %203 = vmatprep.subr.bf16.mxu0 0
    %204 = vmatpush1.bf16.msra.mxu0 0
    %205 = vmatprep.subr.bf16.mxu0 0
    %206 = vmatpush1.bf16.msra.mxu0 0
    %207 = vmatprep.subr.bf16.mxu0 0
    %208 = vmatpush1.bf16.msra.mxu0 0
    %209 = vmatprep.subr.bf16.mxu0 0
    %210 = vmatpush1.bf16.msra.mxu0 0
    %211 = vmatprep.subr.bf16.mxu0 0
    %212 = vmatpush1.bf16.msra.mxu0 0
    %213 = vmatprep.subr.bf16.mxu0 0
    %214 = vmatpush1.bf16.msra.mxu0 0
    %215 = vmatprep.subr.bf16.mxu0 0
    %216 = vmatpush1.bf16.msra.mxu0 %v202
    %217 = vmatprep.subr.bf16.mxu0 0
    %218 = vmatpush1.bf16.msra.mxu0 %v201
    %219 = vmatprep.subr.bf16.mxu0 0
    %220 = vmatpush2.bf16.msra.mxu0 0
    %221 = vmatprep.subr.bf16.mxu0 0
    %222 = vmatpush2.bf16.msra.mxu0 0
    %223 = vmatprep.subr.bf16.mxu0 0
    %224 = vmatpush2.bf16.msra.mxu0 0
    %225 = vmatprep.subr.bf16.mxu0 0
    %226 = vmatpush2.bf16.msra.mxu0 0
    %227 = vmatprep.subr.bf16.mxu0 0
    %228 = vmatpush2.bf16.msra.mxu0 0
    %229 = vmatprep.subr.bf16.mxu0 0
    %230 = vmatpush2.bf16.msra.mxu0 0
    %231 = vmatprep.subr.bf16.mxu0 0
    %232 = vmatpush2.bf16.msra.mxu0 0
    %233 = vmatprep.subr.bf16.mxu0 0
    %234 = vmatpush2.bf16.msra.mxu0 0
    %235 = vmatprep.mubr.bf16.mxu0 0
    %236 = vmatmul.mubr.bf16.gmra.mxu0 %v152
    %v237 = vpop.f32.mrf.mxu0
    %v238 = vadd.f32 0.0, %v237
    %v239 = vpop.f32.mrf.mxu0
    %v240 = vpop.f32.mrf.mxu0
    %v241 = vadd.f32 0.0, %v240
    %v242 = vpop.f32.mrf.mxu0
    %243 = vdwg.mxu0
    %244 = vst [vmem:[#allocation12] sm:$0xff] %v238
    %245 = vst [vmem:[#allocation12 + $0x8] sm:$0xff] %v241
    %v246 = vld [vmem:[#allocation9] sm:$0xff]
    %v247 = vld [vmem:[#allocation9 + $0x8] sm:$0xff]
    %v248 = vld [vmem:[#allocation9 + $0x10] sm:$0xff]
    %v249 = vld [vmem:[#allocation9 + $0x18] sm:$0xff]
    %v250 = vpack.c.bf16 %v247, %v246
    %v251 = vpack.c.bf16 %v249, %v248
    %252 = vmatprep.subr.bf16.mxu0 0
    %253 = vmatpush1.bf16.msra.mxu0 0
    %254 = vmatprep.subr.bf16.mxu0 0
    %255 = vmatpush1.bf16.msra.mxu0 0
    %256 = vmatprep.subr.bf16.mxu0 0
    %257 = vmatpush1.bf16.msra.mxu0 0
    %258 = vmatprep.subr.bf16.mxu0 0
    %259 = vmatpush1.bf16.msra.mxu0 0
    %260 = vmatprep.subr.bf16.mxu0 0
    %261 = vmatpush1.bf16.msra.mxu0 0
    %262 = vmatprep.subr.bf16.mxu0 0
    %263 = vmatpush1.bf16.msra.mxu0 0
    %264 = vmatprep.subr.bf16.mxu0 0
    %265 = vmatpush1.bf16.msra.mxu0 %v251
    %266 = vmatprep.subr.bf16.mxu0 0
    %267 = vmatpush1.bf16.msra.mxu0 %v250
    %268 = vmatprep.subr.bf16.mxu0 0
    %269 = vmatpush2.bf16.msra.mxu0 0
    %270 = vmatprep.subr.bf16.mxu0 0
    %271 = vmatpush2.bf16.msra.mxu0 0
    %272 = vmatprep.subr.bf16.mxu0 0
    %273 = vmatpush2.bf16.msra.mxu0 0
    %274 = vmatprep.subr.bf16.mxu0 0
    %275 = vmatpush2.bf16.msra.mxu0 0
    %276 = vmatprep.subr.bf16.mxu0 0
    %277 = vmatpush2.bf16.msra.mxu0 0
    %278 = vmatprep.subr.bf16.mxu0 0
    %279 = vmatpush2.bf16.msra.mxu0 0
    %280 = vmatprep.subr.bf16.mxu0 0
    %281 = vmatpush2.bf16.msra.mxu0 0
    %282 = vmatprep.subr.bf16.mxu0 0
    %283 = vmatpush2.bf16.msra.mxu0 0
    %284 = vmatprep.mubr.bf16.mxu0 0
    %285 = vmatmul.mubr.bf16.gmra.mxu0 %v152
    %v286 = vpop.f32.mrf.mxu0
    %v287 = vadd.f32 0.0, %v286
    %v288 = vpop.f32.mrf.mxu0
    %v289 = vpop.f32.mrf.mxu0
    %v290 = vadd.f32 0.0, %v289
    %v291 = vpop.f32.mrf.mxu0
    %292 = vdwg.mxu0
    %293 = vst [vmem:[#allocation14] sm:$0xff] %v287
    %294 = vst [vmem:[#allocation14 + $0x8] sm:$0xff] %v290
    // Predicated region
    $region42: #{tpu_custom_call.1} parent=1 // pred_check
      _
    $region43: #{tpu_custom_call.1} parent=1 // pred_check_branch
      %296 = sbr.rel (0) target = $region45
    $region44: #{tpu_custom_call.1} parent=1 // pred_region
      %s298 = ssub.s32 256, 256
      %299 = vsyncadd [#allocation5], %s298
      %s300 = sshll.u32 [#allocation11], 4
      %s301 = int_to_ptr.vmem [resolvable:$true] %s300
      %306 = dma.vmem_to_hbm [thread:$0]  %s301, 256, %s5, [#allocation5], 128, 128, 8
    $region45: #{tpu_custom_call.1} parent=1 // pred_fallthru
      _
    // Predicated region
    $region46: #{tpu_custom_call.1} parent=1 // pred_check
      _
    $region47: #{tpu_custom_call.1} parent=1 // pred_check_branch
      %308 = sbr.rel (0) target = $region49
    $region48: #{tpu_custom_call.1} parent=1 // pred_region
      %s310 = ssub.s32 256, 256
      %311 = vsyncadd [#allocation13], %s310
      %s312 = sshll.u32 [#allocation12], 4
      %s313 = int_to_ptr.vmem [resolvable:$true] %s312
      %318 = dma.vmem_to_hbm [thread:$0]  %s313, 256, %s6, [#allocation13], 128, 128, 8
    $region49: #{tpu_custom_call.1} parent=1 // pred_fallthru
      _
    // Predicated region
    $region50: #{tpu_custom_call.1} parent=1 // pred_check
      _
    $region51: #{tpu_custom_call.1} parent=1 // pred_check_branch
      %320 = sbr.rel (0) target = $region53
    $region52: #{tpu_custom_call.1} parent=1 // pred_region
      %s322 = ssub.s32 256, 256
      %323 = vsyncadd [#allocation13], %s322
      %s324 = sshll.u32 [#allocation14], 4
      %s325 = int_to_ptr.vmem [resolvable:$true] %s324
      %330 = dma.vmem_to_hbm [thread:$0]  %s325, 256, %s7, [#allocation13], 128, 128, 8
    $region53: #{tpu_custom_call.1} parent=1 // pred_fallthru
      _
    // Predicated region
    $region54: #{tpu_custom_call.1} parent=1 // pred_check
      _
    $region55: #{tpu_custom_call.1} parent=1 // pred_check_branch
      %332 = sbr.rel (0) target = $region57
    $region56: #{tpu_custom_call.1} parent=1 // pred_region
      %333 = dma.done [#allocation5], 256
    $region57: #{tpu_custom_call.1} parent=1 // pred_fallthru
      _
    // Predicated region
    $region58: #{tpu_custom_call.1} parent=1 // pred_check
      _
    $region59: #{tpu_custom_call.1} parent=1 // pred_check_branch
      %335 = sbr.rel (0) target = $region61
    $region60: #{tpu_custom_call.1} parent=1 // pred_region
      %336 = dma.done [#allocation13], 256
    $region61: #{tpu_custom_call.1} parent=1 // pred_fallthru
      _
    // Predicated region
    $region62: #{tpu_custom_call.1} parent=1 // pred_check
      _
    $region63: #{tpu_custom_call.1} parent=1 // pred_check_branch
      %338 = sbr.rel (0) target = $region65
    $region64: #{tpu_custom_call.1} parent=1 // pred_region
      %339 = dma.done [#allocation13], 256
    $region65: #{tpu_custom_call.1} parent=1 // pred_fallthru
      _
    %340 = vsyncpa [#allocation4], 1
    %341 = vsyncpa [#allocation7], 1
    %342 = vsyncpa [#allocation10], 1
    %343 = vsyncpa [#allocation5], 1
    %344 = vsyncpa [#allocation13], 1

</llo_original>
